<compile_context>
chip_gen: v5e
topology: v5e:2x2
jax: 0.10.0
libtpu: 0.0.40
codegen_flags: <defaults>
</compile_context>

<pallas_src>
import math
from functools import partial

import jax
import jax.numpy as jnp
from jax.experimental import pallas as pl
from jax.experimental.pallas import tpu as pltpu

LANE = 128
SUBLANE = 8
NEG_BIG = -1e30  # effectively -inf for softmax masking, without inf/NaN risk


def _round_up(n, m):
    return ((n + m - 1) // m) * m


def rnn_chunk_kernel(h0_ref, x_ref, wx_ref, wh_ref, b_ref,
                     out_ref, hfin_ref, h_carry, xwx_ref,
                     *, Tc, Bp, Hp, T, compute_dtype, tail_mask):
    """One grid step == one chunk of Tc timesteps.

    h0_ref : (Bp, Hp)        initial hidden (read once at chunk 0)
    x_ref  : (1, Tc*Bp, I)   this chunk's inputs (pipelined over chunks)
    wx_ref : (I, Np)         fused [i2h | i2o] weight rows for x   (resident)
    wh_ref : (Hp, Np)        fused [i2h | i2o] weight rows for h   (resident)
    b_ref  : (1, Np)         fused bias, -1e30 in logit pad cols   (resident)
    out_ref: (Tc, Bp, Op)    per-timestep log-softmax stream
    hfin_ref: (Bp, Hp)       final hidden (constant block -> written once)
    h_carry: (Bp, Hp) f32    recurrent hidden carried across chunks
    xwx_ref: (Tc*Bp, Np) f32 bulk x-projection scratch
    """
    c = pl.program_id(0)

    @pl.when(c == 0)
    def _():
        h_carry[...] = h0_ref[...]

    # Bulk, non-recurrent projection (+bias) for the whole chunk: one MXU pass
    # with M = Tc*Bp instead of Tc tiny M=Bp matmuls.
    xwx_ref[...] = (jnp.dot(x_ref[0], wx_ref[...],
                            preferred_element_type=jnp.float32)
                    + b_ref[...])

    def step(t, carry):
        h = h_carry[...]                                     # (Bp, Hp) f32
        row = pl.multiple_of(t * Bp, Bp)
        # Only this small recurrent matmul sits on the serial critical path.
        y = (jnp.dot(h.astype(compute_dtype), wh_ref[...],
                     preferred_element_type=jnp.float32)
             + xwx_ref[pl.ds(row, Bp), :])                   # (Bp, Np) f32

        new_h = y[:, :Hp]                                    # tile-aligned slice
        if tail_mask:
            # Padded tail timesteps must not advance the recurrence.
            new_h = jnp.where(c * Tc + t < T, new_h, h)
        h_carry[...] = new_h

        # log-softmax over the logit segment; pad columns carry a -1e30 bias,
        # so no iota mask is needed and the store stays lane-dense.
        logits = y[:, Hp:]                                   # (Bp, Op)
        m = jnp.max(logits, axis=-1, keepdims=True)
        shifted = logits - m
        lse = jnp.log(jnp.sum(jnp.exp(shifted), axis=-1, keepdims=True))
        out_ref[t] = (shifted - lse).astype(out_ref.dtype)
        return carry

    jax.lax.fori_loop(0, Tc, step, 0, unroll=True)

    # Tiny VMEM store; constant-index output block is only DMA'd back to HBM
    # once, after the last chunk (no per-step hidden writeback).
    hfin_ref[...] = h_carry[...]


@partial(jax.jit, static_argnames=("hidden_size", "output_size",
                                   "chunk_steps", "compute_dtype"))
def rnn_sequence(x_seq, hidden, wx, wh, bias, *, hidden_size, output_size,
                 chunk_steps=8, compute_dtype=jnp.bfloat16):
    """Run the RNN cell over a (T, B, I) sequence in ONE pallas_call.

    Returns (outputs, final_hidden): ((T, B, O) log-softmax, (B, H)).
    """
    T, B, I = x_seq.shape
    Hp = _round_up(hidden_size, LANE)
    Op = _round_up(output_size, LANE)
    Np = Hp + Op
    Bp = _round_up(B, SUBLANE)

    Tc = max(1, min(chunk_steps, T))
    num_chunks = -(-T // Tc)
    Tp = num_chunks * Tc

    x_p = jnp.pad(x_seq.astype(jnp.float32),
                  ((0, Tp - T), (0, Bp - B), (0, 0))).astype(compute_dtype)
    x_flat = x_p.reshape(num_chunks, Tc * Bp, I)     # layout plumbing, in XLA
    h_p = jnp.pad(hidden.astype(jnp.float32),
                  ((0, Bp - B), (0, Hp - hidden_size)))

    kernel = partial(rnn_chunk_kernel, Tc=Tc, Bp=Bp, Hp=Hp, T=T,
                     compute_dtype=compute_dtype,
                     tail_mask=(T % Tc != 0))

    out_logits, h_final = pl.pallas_call(
        kernel,
        out_shape=(jax.ShapeDtypeStruct((Tp, Bp, Op), jnp.float32),
                   jax.ShapeDtypeStruct((Bp, Hp), jnp.float32)),
        grid_spec=pltpu.PrefetchScalarGridSpec(
            num_scalar_prefetch=0,
            grid=(num_chunks,),
            in_specs=[
                pl.BlockSpec((Bp, Hp), lambda c: (0, 0)),          # h0
                pl.BlockSpec((1, Tc * Bp, I), lambda c: (c, 0, 0)),  # x chunk
                pl.BlockSpec((I, Np), lambda c: (0, 0)),           # Wx (resident)
                pl.BlockSpec((Hp, Np), lambda c: (0, 0)),          # Wh (resident)
                pl.BlockSpec((1, Np), lambda c: (0, 0)),           # bias (resident)
            ],
            out_specs=[
                pl.BlockSpec((Tc, Bp, Op), lambda c: (c, 0, 0)),   # log-softmax stream
                pl.BlockSpec((Bp, Hp), lambda c: (0, 0)),          # final hidden
            ],
            scratch_shapes=[
                pltpu.VMEM((Bp, Hp), jnp.float32),                 # hidden carry
                pltpu.VMEM((Tc * Bp, Np), jnp.float32),            # bulk x@Wx + b
            ],
        ),
        compiler_params=pltpu.CompilerParams(
            dimension_semantics=("arbitrary",)),   # time recurrence => sequential
    )(h_p, x_flat, wx.astype(compute_dtype), wh.astype(compute_dtype), bias)

    outputs = out_logits[:T, :B, :output_size]     # (T, B, O)
    final_hidden = h_final[:B, :hidden_size]       # (B, H)
    return outputs, final_hidden


def rnn_forward(x, hidden, wx, wh, bias, *, hidden_size, output_size,
                compute_dtype=jnp.bfloat16):
    """Single step, same semantics as RNN.forward(input, hidden)."""
    outputs, new_hidden = rnn_sequence(
        x[None], hidden, wx, wh, bias,
        hidden_size=hidden_size, output_size=output_size,
        chunk_steps=1, compute_dtype=compute_dtype)
    return outputs[0], new_hidden


def init_linear_params(key, in_features, out_features):
    """PyTorch-style Linear init, stored transposed: (in_features, out_features)."""
    kw, kb = jax.random.split(key)
    bound = 1.0 / math.sqrt(in_features)
    w = jax.random.uniform(kw, (in_features, out_features),
                           minval=-bound, maxval=bound, dtype=jnp.float32)
    b = jax.random.uniform(kb, (1, out_features),
                           minval=-bound, maxval=bound, dtype=jnp.float32)
    return w, b


def pack_params(w_i2h, b_i2h, w_i2o, b_i2o, input_size):
    """Fuse i2h/i2o into lane-aligned segments and row-split into x/h blocks.

    Column layout (Np = Hp + Op, both 128-multiples):
      [0, H)        new hidden        [H, Hp)      zero pad (carry stays 0)
      [Hp, Hp+O)    logits            [Hp+O, Np)   pad (bias = -1e30 -> masked)
    """
    I = input_size
    H = w_i2h.shape[1]
    O = w_i2o.shape[1]
    Hp = _round_up(H, LANE)
    Op = _round_up(O, LANE)
    Np = Hp + Op

    wx = jnp.zeros((I, Np), jnp.float32)
    wx = wx.at[:, :H].set(w_i2h[:I])
    wx = wx.at[:, Hp:Hp + O].set(w_i2o[:I])

    wh = jnp.zeros((Hp, Np), jnp.float32)
    wh = wh.at[:H, :H].set(w_i2h[I:])
    wh = wh.at[:H, Hp:Hp + O].set(w_i2o[I:])

    bias = jnp.full((1, Np), NEG_BIG, jnp.float32)
    bias = bias.at[:, :Hp].set(0.0)
    bias = bias.at[:, :H].set(b_i2h)
    bias = bias.at[:, Hp:Hp + O].set(b_i2o)
    return wx, wh, bias


if __name__ == "__main__":
    input_size, hidden_size, output_size = 16, 32, 8
    batch, seq_len = 2, 8

    key = jax.random.PRNGKey(0)
    k_x, k_h, k_i2h, k_i2o = jax.random.split(key, 4)

    x_seq = jax.random.normal(k_x, (seq_len, batch, input_size), jnp.float32)
    hidden0 = jax.random.normal(k_h, (batch, hidden_size), jnp.float32)

    w_i2h, b_i2h = init_linear_params(k_i2h, input_size + hidden_size, hidden_size)
    w_i2o, b_i2o = init_linear_params(k_i2o, input_size + hidden_size, output_size)
    wx, wh, bias = pack_params(w_i2h, b_i2h, w_i2o, b_i2o, input_size)

    cdt = jnp.bfloat16  # MXU operand dtype; accumulation/epilogue stay f32
    w_i2h_b = w_i2h.astype(cdt)
    w_i2o_b = w_i2o.astype(cdt)

    # ---- single step: exact semantics of RNN.forward(input, hidden) --------
    out, new_hidden = rnn_forward(x_seq[0], hidden0, wx, wh, bias,
                                  hidden_size=hidden_size,
                                  output_size=output_size, compute_dtype=cdt)
    out = jax.block_until_ready(out)
    new_hidden = jax.block_until_ready(new_hidden)

    comb = jnp.concatenate([x_seq[0], hidden0], axis=1).astype(cdt)
    ref_hidden = jnp.dot(comb, w_i2h_b, preferred_element_type=jnp.float32) + b_i2h
    ref_out = jax.nn.log_softmax(
        jnp.dot(comb, w_i2o_b, preferred_element_type=jnp.float32) + b_i2o, axis=-1)

    assert out.shape == (batch, output_size)
    assert new_hidden.shape == (batch, hidden_size)
    assert jnp.allclose(out, ref_out, atol=5e-3, rtol=5e-3)
    assert jnp.allclose(new_hidden, ref_hidden, atol=5e-3, rtol=5e-3)

    # ---- full sequence, chunk_steps=3 (multi-chunk carry + tail masking) ----
    outs, h_final = rnn_sequence(x_seq, hidden0, wx, wh, bias,
                                 hidden_size=hidden_size,
                                 output_size=output_size,
                                 chunk_steps=3, compute_dtype=cdt)
    outs = jax.block_until_ready(outs)
    h_final = jax.block_until_ready(h_final)

    def ref_step(h, x):
        cmb = jnp.concatenate([x, h], axis=1).astype(cdt)
        h_new = jnp.dot(cmb, w_i2h_b, preferred_element_type=jnp.float32) + b_i2h
        logits = jnp.dot(cmb, w_i2o_b, preferred_element_type=jnp.float32) + b_i2o
        return h_new, jax.nn.log_softmax(logits, axis=-1)

    ref_h_final, ref_outs = jax.lax.scan(ref_step, hidden0, x_seq)

    assert outs.shape == (seq_len, batch, output_size)
    assert h_final.shape == (batch, hidden_size)
    assert jnp.allclose(outs, ref_outs, atol=5e-3, rtol=5e-3)
    assert jnp.allclose(h_final, ref_h_final, atol=5e-3, rtol=5e-3)

    print("KERNEL_OK")
</pallas_src>

<mosaic_0001>
module attributes {stable_mosaic.version = 11 : i64} {
  func.func @rnn_chunk_kernel(%arg0: i32, %arg1: memref<8x128xf32, #tpu.memory_space<vmem>>, %arg2: memref<1x8x16xbf16, #tpu.memory_space<vmem>>, %arg3: memref<16x256xbf16, #tpu.memory_space<vmem>>, %arg4: memref<128x256xbf16, #tpu.memory_space<vmem>>, %arg5: memref<1x256xf32, #tpu.memory_space<vmem>>, %arg6: memref<1x8x128xf32, #tpu.memory_space<vmem>>, %arg7: memref<8x128xf32, #tpu.memory_space<vmem>>, %arg8: memref<8x128xf32, #tpu.memory_space<vmem>>, %arg9: memref<8x256xf32, #tpu.memory_space<vmem>>) attributes {dimension_semantics = [#tpu.dimension_semantics<arbitrary>], iteration_bounds = array<i64: 1>, scalar_prefetch = 0 : i64, scratch_operands = 2 : i64, tpu.core_type = #tpu.core_type<tc>, window_params = [{pipeline_mode = #tpu.pipeline_mode<synchronous>, transform_indices = @transform_0, window_bounds = array<i64: 8, 128>}, {transform_indices = @transform_1, window_bounds = array<i64: 1, 8, 16>}, {pipeline_mode = #tpu.pipeline_mode<synchronous>, transform_indices = @transform_2, window_bounds = array<i64: 16, 256>}, {pipeline_mode = #tpu.pipeline_mode<synchronous>, transform_indices = @transform_3, window_bounds = array<i64: 128, 256>}, {pipeline_mode = #tpu.pipeline_mode<synchronous>, transform_indices = @transform_4, window_bounds = array<i64: 1, 256>}, {transform_indices = @transform_5, window_bounds = array<i64: 1, 8, 128>}, {pipeline_mode = #tpu.pipeline_mode<synchronous>, transform_indices = @transform_6, window_bounds = array<i64: 8, 128>}]} {
    %c0_i32 = arith.constant 0 : i32
    %0 = arith.cmpi eq, %arg0, %c0_i32 : i32
    %1 = arith.extui %0 : i1 to i32
    %c0_i32_0 = arith.constant 0 : i32
    %2 = arith.cmpi ne, %1, %c0_i32_0 : i32
    scf.if %2 {
      %c0_26 = arith.constant 0 : index
      %c0_27 = arith.constant 0 : index
      %39 = vector.load %arg1[%c0_26, %c0_27] : memref<8x128xf32, #tpu.memory_space<vmem>>, vector<8x128xf32>
      %c0_28 = arith.constant 0 : index
      %c0_29 = arith.constant 0 : index
      %40 = vector.load %arg8[%c0_28, %c0_29] : memref<8x128xf32, #tpu.memory_space<vmem>>, vector<8x128xf32>
      tpu.vector_store %arg8[%c0_28, %c0_29], %39 {strides = array<i32>} : memref<8x128xf32, #tpu.memory_space<vmem>>, vector<8x128xf32>,
    } else {
    }
    %c0 = arith.constant 0 : index
    %c0_1 = arith.constant 0 : index
    %c0_2 = arith.constant 0 : index
    %3 = vector.load %arg2[%c0, %c0_1, %c0_2] : memref<1x8x16xbf16, #tpu.memory_space<vmem>>, vector<1x8x16xbf16>
    %4 = vector.shape_cast %3 : vector<1x8x16xbf16> to vector<8x16xbf16>
    %c0_3 = arith.constant 0 : index
    %c0_4 = arith.constant 0 : index
    %5 = vector.load %arg3[%c0_3, %c0_4] : memref<16x256xbf16, #tpu.memory_space<vmem>>, vector<16x256xbf16>
    %cst = arith.constant dense<0.000000e+00> : vector<8x256xf32>
    %6 = tpu.matmul %4, %5, %cst {dimension_numbers = #tpu.dot_dimension_numbers<[1], [0], [0], [1], [0, 0, 1, 1], [], []>} : vector<8x16xbf16>, vector<16x256xbf16>, vector<8x256xf32> -> vector<8x256xf32>
    %c0_5 = arith.constant 0 : index
    %c0_6 = arith.constant 0 : index
    %7 = vector.load %arg5[%c0_5, %c0_6] : memref<1x256xf32, #tpu.memory_space<vmem>>, vector<1x256xf32>
    %8 = vector.broadcast %7 : vector<1x256xf32> to vector<8x256xf32>
    %9 = arith.addf %6, %8 : vector<8x256xf32>
    %c0_7 = arith.constant 0 : index
    %c0_8 = arith.constant 0 : index
    %10 = vector.load %arg9[%c0_7, %c0_8] : memref<8x256xf32, #tpu.memory_space<vmem>>, vector<8x256xf32>
    tpu.vector_store %arg9[%c0_7, %c0_8], %9 {strides = array<i32>} : memref<8x256xf32, #tpu.memory_space<vmem>>, vector<8x256xf32>,
    %c0_i32_9 = arith.constant 0 : i32
    %c0_10 = arith.constant 0 : index
    %c0_11 = arith.constant 0 : index
    %11 = vector.load %arg8[%c0_10, %c0_11] : memref<8x128xf32, #tpu.memory_space<vmem>>, vector<8x128xf32>
    %c8_i32 = arith.constant 8 : i32
    %12 = arith.muli %c0_i32_9, %c8_i32 : i32
    %13 = tpu.assume_multiple %12, 8 : i32
    %14 = arith.truncf %11 : vector<8x128xf32> to vector<8x128xbf16>
    %c0_12 = arith.constant 0 : index
    %c0_13 = arith.constant 0 : index
    %15 = vector.load %arg4[%c0_12, %c0_13] : memref<128x256xbf16, #tpu.memory_space<vmem>>, vector<128x256xbf16>
    %cst_14 = arith.constant dense<0.000000e+00> : vector<8x256xf32>
    %16 = tpu.matmul %14, %15, %cst_14 {dimension_numbers = #tpu.dot_dimension_numbers<[1], [0], [0], [1], [0, 0, 1, 1], [], []>} : vector<8x128xbf16>, vector<128x256xbf16>, vector<8x256xf32> -> vector<8x256xf32>
    %17 = arith.index_cast %13 : i32 to index
    %c0_15 = arith.constant 0 : index
    %18 = vector.load %arg9[%17, %c0_15] : memref<8x256xf32, #tpu.memory_space<vmem>>, vector<8x256xf32>
    %19 = arith.addf %16, %18 : vector<8x256xf32>
    %20 = vector.extract_strided_slice %19 {offsets = [0, 0], sizes = [8, 128], strides = [1, 1]} : vector<8x256xf32> to vector<8x128xf32>
    %c0_16 = arith.constant 0 : index
    %c0_17 = arith.constant 0 : index
    %21 = vector.load %arg8[%c0_16, %c0_17] : memref<8x128xf32, #tpu.memory_space<vmem>>, vector<8x128xf32>
    tpu.vector_store %arg8[%c0_16, %c0_17], %20 {strides = array<i32>} : memref<8x128xf32, #tpu.memory_space<vmem>>, vector<8x128xf32>,
    %22 = vector.extract_strided_slice %19 {offsets = [0, 128], sizes = [8, 128], strides = [1, 1]} : vector<8x256xf32> to vector<8x128xf32>
    %cst_18 = arith.constant dense<0xFF800000> : vector<8xf32>
    %23 = vector.multi_reduction <maximumf>, %22, %cst_18 [1] : vector<8x128xf32> to vector<8xf32>
    %24 = vector.shape_cast %23 : vector<8xf32> to vector<8x1xf32>
    %25 = vector.broadcast %24 : vector<8x1xf32> to vector<8x128xf32>
    %26 = arith.subf %22, %25 : vector<8x128xf32>
    %27 = math.exp %26 : vector<8x128xf32>
    %cst_19 = arith.constant dense<0.000000e+00> : vector<8xf32>
    %28 = vector.multi_reduction <add>, %27, %cst_19 [1] : vector<8x128xf32> to vector<8xf32>
    %29 = vector.shape_cast %28 : vector<8xf32> to vector<8x1xf32>
    %30 = math.log %29 : vector<8x1xf32>
    %31 = vector.broadcast %30 : vector<8x1xf32> to vector<8x128xf32>
    %32 = arith.subf %26, %31 : vector<8x128xf32>
    %33 = arith.index_cast %c0_i32_9 : i32 to index
    %c0_20 = arith.constant 0 : index
    %c0_21 = arith.constant 0 : index
    %34 = vector.load %arg6[%33, %c0_20, %c0_21] : memref<1x8x128xf32, #tpu.memory_space<vmem>>, vector<1x8x128xf32>
    %35 = vector.shape_cast %34 : vector<1x8x128xf32> to vector<8x128xf32>
    %36 = vector.shape_cast %32 : vector<8x128xf32> to vector<1x8x128xf32>
    tpu.vector_store %arg6[%33, %c0_20, %c0_21], %36 {strides = array<i32>} : memref<1x8x128xf32, #tpu.memory_space<vmem>>, vector<1x8x128xf32>,
    %c1_i32 = arith.constant 1 : i32
    %c0_22 = arith.constant 0 : index
    %c0_23 = arith.constant 0 : index
    %37 = vector.load %arg8[%c0_22, %c0_23] : memref<8x128xf32, #tpu.memory_space<vmem>>, vector<8x128xf32>
    %c0_24 = arith.constant 0 : index
    %c0_25 = arith.constant 0 : index
    %38 = vector.load %arg7[%c0_24, %c0_25] : memref<8x128xf32, #tpu.memory_space<vmem>>, vector<8x128xf32>
    tpu.vector_store %arg7[%c0_24, %c0_25], %37 {strides = array<i32>} : memref<8x128xf32, #tpu.memory_space<vmem>>, vector<8x128xf32>,
    return
  }
  func.func @transform_0(%arg0: i32) -> (i32, i32) {
    %c0_i32 = arith.constant 0 : i32
    %c0_i32_0 = arith.constant 0 : i32
    %c0_i32_1 = arith.constant 0 : i32
    return %c0_i32, %c0_i32_0 : i32, i32
  }
  func.func @transform_1(%arg0: i32) -> (i32, i32, i32) {
    %c0_i32 = arith.constant 0 : i32
    %c0_i32_0 = arith.constant 0 : i32
    %c0_i32_1 = arith.constant 0 : i32
    return %arg0, %c0_i32, %c0_i32_0 : i32, i32, i32
  }
  func.func @transform_2(%arg0: i32) -> (i32, i32) {
    %c0_i32 = arith.constant 0 : i32
    %c0_i32_0 = arith.constant 0 : i32
    %c0_i32_1 = arith.constant 0 : i32
    return %c0_i32, %c0_i32_0 : i32, i32
  }
  func.func @transform_3(%arg0: i32) -> (i32, i32) {
    %c0_i32 = arith.constant 0 : i32
    %c0_i32_0 = arith.constant 0 : i32
    %c0_i32_1 = arith.constant 0 : i32
    return %c0_i32, %c0_i32_0 : i32, i32
  }
  func.func @transform_4(%arg0: i32) -> (i32, i32) {
    %c0_i32 = arith.constant 0 : i32
    %c0_i32_0 = arith.constant 0 : i32
    %c0_i32_1 = arith.constant 0 : i32
    return %c0_i32, %c0_i32_0 : i32, i32
  }
  func.func @transform_5(%arg0: i32) -> (i32, i32, i32) {
    %c0_i32 = arith.constant 0 : i32
    %c0_i32_0 = arith.constant 0 : i32
    %c0_i32_1 = arith.constant 0 : i32
    return %arg0, %c0_i32, %c0_i32_0 : i32, i32, i32
  }
  func.func @transform_6(%arg0: i32) -> (i32, i32) {
    %c0_i32 = arith.constant 0 : i32
    %c0_i32_0 = arith.constant 0 : i32
    %c0_i32_1 = arith.constant 0 : i32
    return %c0_i32, %c0_i32_0 : i32, i32
  }
}

</mosaic_0001>

<llo_original>
// kernel: rnn_sequence.1
$region0: #{rnn_sequence.1}
  #allocation0 [shape = 'u32[]', space=smem, size = 0x4, offset = 0x4, fixed_abs, tag = 'smem constant byte address 0x4 - core index']
  #allocation1 [shape = 'u32[72,128]{1,0:T(1,128)}', space=vmem, size = 0x9000, scoped, tag = 'internal scratch']
  #allocation2 [shape = 'f32[8,128]{1,0:T(8,128)}', space=vmem, size = 0x1000, scoped, tag = 'scratch operand']
  #allocation3 [shape = 'f32[8,256]{1,0:T(8,128)}', space=vmem, size = 0x2000, scoped, tag = 'scratch operand']
  %s0 = inlined_call_operand.vmem [shape: f32[8,128], index: 0, kind: input, shape index: {}]
  %s1 = inlined_call_operand.vmem [shape: bf16[1,8,16], index: 1, kind: input, shape index: {}]
  %s2 = inlined_call_operand.vmem [shape: bf16[16,256], index: 2, kind: input, shape index: {}]
  %s3 = inlined_call_operand.vmem [shape: bf16[128,256], index: 3, kind: input, shape index: {}]
  %s4 = inlined_call_operand.vmem [shape: f32[1,256], index: 4, kind: input, shape index: {}]
  %s5 = inlined_call_operand.vmem [shape: f32[1,8,128], index: 5, kind: output, shape index: {0}]
  %s6 = inlined_call_operand.vmem [shape: f32[8,128], index: 6, kind: output, shape index: {1}]
  %7 = xla_tuple %s5, %s6
  %s8 = sld [smem:[#allocation0]]
  $region42: #{rnn_sequence.1} parent=0
    _
  %s10 = ssub.s32 1, %s8
  %s11 = scalar_select 0, %s10, %s8
  // Predicated region
  $region2: #{rnn_sequence.1} parent=0 // pred_check
    _
  $region3: #{rnn_sequence.1} parent=0 // pred_check_branch
    %13 = sbr.rel (0) target = $region5
  $region4: #{rnn_sequence.1} parent=0 // pred_region
    _
  $region5: #{rnn_sequence.1} parent=0 // pred_fallthru
    _
  // Predicated region
  $region6: #{rnn_sequence.1} parent=0 // pred_check
    _
  $region7: #{rnn_sequence.1} parent=0 // pred_check_branch
    %15 = sbr.rel (0) target = $region9
  $region8: #{rnn_sequence.1} parent=0 // pred_region
    _
  $region9: #{rnn_sequence.1} parent=0 // pred_fallthru
    _
  // Predicated region
  $region10: #{rnn_sequence.1} parent=0 // pred_check
    _
  $region11: #{rnn_sequence.1} parent=0 // pred_check_branch
    %17 = sbr.rel (0) target = $region13
  $region12: #{rnn_sequence.1} parent=0 // pred_region
    _
  $region13: #{rnn_sequence.1} parent=0 // pred_fallthru
    _
  // Predicated region
  $region14: #{rnn_sequence.1} parent=0 // pred_check
    _
  $region15: #{rnn_sequence.1} parent=0 // pred_check_branch
    %19 = sbr.rel (0) target = $region17
  $region16: #{rnn_sequence.1} parent=0 // pred_region
    _
  $region17: #{rnn_sequence.1} parent=0 // pred_fallthru
    _
  // Predicated region
  $region18: #{rnn_sequence.1} parent=0 // pred_check
    _
  $region19: #{rnn_sequence.1} parent=0 // pred_check_branch
    %21 = sbr.rel (0) target = $region21
  $region20: #{rnn_sequence.1} parent=0 // pred_region
    _
  $region21: #{rnn_sequence.1} parent=0 // pred_fallthru
    _
  %p23 = scmp.eq.s32.totalorder 0, 0
  // Predicated region
  $region22: #{rnn_sequence.1} parent=0 // pred_check
    %p24 = pneg %p23
  $region23: #{rnn_sequence.1} parent=0 // pred_check_branch
    %26 = sbr.rel (%p24) target = $region25
  $region24: #{rnn_sequence.1} parent=0 // pred_region
    %v27 = vld [vmem:[%s0] sm:$0xff]
    %28 = vst [vmem:[#allocation2] sm:$0xff] %v27
  $region25: #{rnn_sequence.1} parent=0 // pred_fallthru
    _
  %v29 = vld [vmem:[%s1] sm:$0xf]
  %v30 = vld [vmem:[%s2] sm:$0xff]
  %v31 = vld [vmem:[%s2 + $0x8] sm:$0xff]
  %v32 = vld [vmem:[%s4] sm:$0x3]
  %v34 = vperm.slane %v32, 0
  %v35 = vperm.slane %v32, 1
  %v40 = vunpack.c.l.b16 %v30
  %v41 = vunpack.c.h.b16 %v30
  %v42 = vunpack.c.l.b16 %v31
  %v43 = vunpack.c.h.b16 %v31
  %v44 = vpack.c.b16 %v42, %v40
  %v45 = vpack.c.b16 %v43, %v41
  %vm48 = vcmask 130048
  %v50 = vsel %vm48, %v29, 0
  %52 = vmatpush.bf16.msra.mxu0 0
  %53 = vmatpush.bf16.msra.mxu0 0
  %54 = vmatpush.bf16.msra.mxu0 0
  %55 = vmatpush.bf16.msra.mxu0 0
  %56 = vmatpush.bf16.msra.mxu0 0
  %57 = vmatpush.bf16.msra.mxu0 0
  %58 = vmatpush.bf16.msra.mxu0 0
  %59 = vmatpush.bf16.msra.mxu0 %v44
  %60 = vmatmul.bf16.gmra.mxu0 %v50
  %v61 = vpop.f32.mrf.mxu0
  %v62 = vadd.f32 %v34, %v61
  %v63 = vpop.f32.mrf.mxu0
  %64 = vdwg.mxu0
  %65 = vmatpush.bf16.msra.mxu0 0
  %66 = vmatpush.bf16.msra.mxu0 0
  %67 = vmatpush.bf16.msra.mxu0 0
  %68 = vmatpush.bf16.msra.mxu0 0
  %69 = vmatpush.bf16.msra.mxu0 0
  %70 = vmatpush.bf16.msra.mxu0 0
  %71 = vmatpush.bf16.msra.mxu0 0
  %72 = vmatpush.bf16.msra.mxu0 %v45
  %73 = vmatmul.bf16.gmra.mxu0 %v50
  %v74 = vpop.f32.mrf.mxu0
  %v75 = vadd.f32 %v35, %v74
  %v76 = vpop.f32.mrf.mxu0
  %77 = vdwg.mxu0
  %78 = vst [vmem:[#allocation3] sm:$0xff] %v62
  %79 = vst [vmem:[#allocation3 + $0x8] sm:$0xff] %v75
  %v80 = vld [vmem:[#allocation2] sm:$0xff]
  %v81 = vpack.c.bf16 %v80, %v80
  %v82 = vld [vmem:[%s3] sm:$0xff]
  %v83 = vld [vmem:[%s3 + $0x8] sm:$0xff]
  %v84 = vld [vmem:[%s3 + $0x10] sm:$0xff]
  %v85 = vld [vmem:[%s3 + $0x18] sm:$0xff]
  %v86 = vld [vmem:[%s3 + $0x20] sm:$0xff]
  %v87 = vld [vmem:[%s3 + $0x28] sm:$0xff]
  %v88 = vld [vmem:[%s3 + $0x30] sm:$0xff]
  %v89 = vld [vmem:[%s3 + $0x38] sm:$0xff]
  %v90 = vld [vmem:[%s3 + $0x40] sm:$0xff]
  %v91 = vld [vmem:[%s3 + $0x48] sm:$0xff]
  %v92 = vld [vmem:[%s3 + $0x50] sm:$0xff]
  %v93 = vld [vmem:[%s3 + $0x58] sm:$0xff]
  %v94 = vld [vmem:[%s3 + $0x60] sm:$0xff]
  %v95 = vld [vmem:[%s3 + $0x68] sm:$0xff]
  %v96 = vld [vmem:[%s3 + $0x70] sm:$0xff]
  %v97 = vld [vmem:[%s3 + $0x78] sm:$0xff]
  %s98 = smul.u32 0, 2
  %s99 = smul.addr %s98, 8
  %s100 = scalar_lea.vmem [#allocation3], %s99
  %v101 = vld [vmem:[%s100] sm:$0xff]
  %v102 = vld [vmem:[%s100 + $0x8] sm:$0xff]
  %v119 = vunpack.c.l.b16 %v82
  %v120 = vunpack.c.h.b16 %v82
  %v121 = vunpack.c.l.b16 %v83
  %v122 = vunpack.c.h.b16 %v83
  %v123 = vunpack.c.l.b16 %v84
  %v124 = vunpack.c.h.b16 %v84
  %v125 = vunpack.c.l.b16 %v85
  %v126 = vunpack.c.h.b16 %v85
  %v127 = vunpack.c.l.b16 %v86
  %v128 = vunpack.c.h.b16 %v86
  %v129 = vunpack.c.l.b16 %v87
  %v130 = vunpack.c.h.b16 %v87
  %v131 = vunpack.c.l.b16 %v88
  %v132 = vunpack.c.h.b16 %v88
  %v133 = vunpack.c.l.b16 %v89
  %v134 = vunpack.c.h.b16 %v89
  %v135 = vunpack.c.l.b16 %v90
  %v136 = vunpack.c.h.b16 %v90
  %v137 = vunpack.c.l.b16 %v91
  %v138 = vunpack.c.h.b16 %v91
  %v139 = vunpack.c.l.b16 %v92
  %v140 = vunpack.c.h.b16 %v92
  %v141 = vunpack.c.l.b16 %v93
  %v142 = vunpack.c.h.b16 %v93
  %v143 = vunpack.c.l.b16 %v94
  %v144 = vunpack.c.h.b16 %v94
  %v145 = vunpack.c.l.b16 %v95
  %v146 = vunpack.c.h.b16 %v95
  %v147 = vunpack.c.l.b16 %v96
  %v148 = vunpack.c.h.b16 %v96
  %v149 = vunpack.c.l.b16 %v97
  %v150 = vunpack.c.h.b16 %v97
  %v151 = vpack.c.b16 %v121, %v119
  %v152 = vpack.c.b16 %v122, %v120
  %v153 = vpack.c.b16 %v125, %v123
  %v154 = vpack.c.b16 %v126, %v124
  %v155 = vpack.c.b16 %v129, %v127
  %v156 = vpack.c.b16 %v130, %v128
  %v157 = vpack.c.b16 %v133, %v131
  %v158 = vpack.c.b16 %v134, %v132
  %v159 = vpack.c.b16 %v137, %v135
  %v160 = vpack.c.b16 %v138, %v136
  %v161 = vpack.c.b16 %v141, %v139
  %v162 = vpack.c.b16 %v142, %v140
  %v163 = vpack.c.b16 %v145, %v143
  %v164 = vpack.c.b16 %v146, %v144
  %v165 = vpack.c.b16 %v149, %v147
  %v166 = vpack.c.b16 %v150, %v148
  %183 = vmatpush.bf16.msra.mxu0 %v165
  %184 = vmatpush.bf16.msra.mxu0 %v163
  %185 = vmatpush.bf16.msra.mxu0 %v161
  %186 = vmatpush.bf16.msra.mxu0 %v159
  %187 = vmatpush.bf16.msra.mxu0 %v157
  %188 = vmatpush.bf16.msra.mxu0 %v155
  %189 = vmatpush.bf16.msra.mxu0 %v153
  %190 = vmatpush.bf16.msra.mxu0 %v151
  %191 = vmatmul.bf16.gmra.mxu0 %v81
  %v192 = vpop.f32.mrf.mxu0
  %v193 = vadd.f32 %v101, %v192
  %v194 = vpop.f32.mrf.mxu0
  %195 = vdwg.mxu0
  %196 = vmatpush.bf16.msra.mxu0 %v166
  %197 = vmatpush.bf16.msra.mxu0 %v164
  %198 = vmatpush.bf16.msra.mxu0 %v162
  %199 = vmatpush.bf16.msra.mxu0 %v160
  %200 = vmatpush.bf16.msra.mxu0 %v158
  %201 = vmatpush.bf16.msra.mxu0 %v156
  %202 = vmatpush.bf16.msra.mxu0 %v154
  %203 = vmatpush.bf16.msra.mxu0 %v152
  %204 = vmatmul.bf16.gmra.mxu0 %v81
  %v205 = vpop.f32.mrf.mxu0
  %v206 = vadd.f32 %v102, %v205
  %v207 = vpop.f32.mrf.mxu0
  %208 = vdwg.mxu0
  %209 = vst [vmem:[#allocation2] sm:$0xff] %v193
  %210 = vmax.xlane.f32.xlu0 %v206
  %v211 = vpop.xlane.xlu0 %210
  %v212 = vsub.f32 %v206, %v211
  %v213 = vmul.f32 %v212, 1.442695
  %v214 = vpow.pop %v213
  %215 = vadd.xlane.f32.xlu0 %v214
  %v216 = vpop.xlane.xlu0 %215
  %v217 = vlog2.pop %v216
  %v218 = vmul.f32 %v217, 0.6931472
  %v219 = vsub.f32 %v212, %v218
  %220 = vst [vmem:[%s5] sm:$0xff] %v219
  %v221 = vld [vmem:[#allocation2] sm:$0xff]
  %222 = vst [vmem:[%s6] sm:$0xff] %v221
  // Predicated region
  $region26: #{rnn_sequence.1} parent=0 // pred_check
    _
  $region27: #{rnn_sequence.1} parent=0 // pred_check_branch
    %224 = sbr.rel (0) target = $region29
  $region28: #{rnn_sequence.1} parent=0 // pred_region
    _
  $region29: #{rnn_sequence.1} parent=0 // pred_fallthru
    _
  // Predicated region
  $region30: #{rnn_sequence.1} parent=0 // pred_check
    _
  $region31: #{rnn_sequence.1} parent=0 // pred_check_branch
    %226 = sbr.rel (0) target = $region33
  $region32: #{rnn_sequence.1} parent=0 // pred_region
    _
  $region33: #{rnn_sequence.1} parent=0 // pred_fallthru
    _
  // Predicated region
  $region34: #{rnn_sequence.1} parent=0 // pred_check
    _
  $region35: #{rnn_sequence.1} parent=0 // pred_check_branch
    %228 = sbr.rel (0) target = $region37
  $region36: #{rnn_sequence.1} parent=0 // pred_region
    _
  $region37: #{rnn_sequence.1} parent=0 // pred_fallthru
    _
  // Predicated region
  $region38: #{rnn_sequence.1} parent=0 // pred_check
    _
  $region39: #{rnn_sequence.1} parent=0 // pred_check_branch
    %230 = sbr.rel (0) target = $region41
  $region40: #{rnn_sequence.1} parent=0 // pred_region
    _
  $region41: #{rnn_sequence.1} parent=0 // pred_fallthru
    _

</llo_original>
